<compile_context>
chip_gen: v7x
topology: tpu7x:2x2x1
jax: 0.10.0
libtpu: 0.0.40
codegen_flags: <defaults>
</compile_context>

<pallas_src>
import jax
import jax.numpy as jnp
from jax.experimental import pallas as pl
from jax.experimental.pallas import tpu as pltpu

H1 = 128  # hidden width 64, zero-padded to a full 128-lane vreg
H2 = 128  # hidden width 120, zero-padded to a full 128-lane vreg


def _round_up(n: int, m: int) -> int:
    return (n + m - 1) // m * m


# ----------------------------------------------------------------------------
# Kernel
# ----------------------------------------------------------------------------
def mlp_kernel(x_ref, w1_ref, b1_ref, w2_ref, b2_ref, w3_ref, b3_ref, o_ref):
    # x arrives as f32 straight from HBM; cast to bf16 on the VPU here (cheaper
    # than a separate XLA cast pass re-reading/re-writing x in HBM).
    xb = x_ref[...].astype(jnp.bfloat16)

    # fc1: [tile_b, dim] @ [dim, 128] -> f32 accum, bias, ReLU, back to bf16.
    h1 = jnp.dot(xb, w1_ref[...], preferred_element_type=jnp.float32)
    h1 = jnp.maximum(h1 + b1_ref[...], 0.0).astype(jnp.bfloat16)

    # fc2: [tile_b, 128] @ [128, 128]
    h2 = jnp.dot(h1, w2_ref[...], preferred_element_type=jnp.float32)
    h2 = jnp.maximum(h2 + b2_ref[...], 0.0).astype(jnp.bfloat16)

    # fc3: [tile_b, 128] @ [128, dim]
    out = jnp.dot(h2, w3_ref[...], preferred_element_type=jnp.float32)
    # TODO(synk): when dim < 128, fold the output tile to a lane-dense
    # (tile_b*dim//128, 128) slab before storing to avoid masked vst.msk stores.
    o_ref[...] = (out + b3_ref[...]).astype(o_ref.dtype)


# ----------------------------------------------------------------------------
# Wrapper
# ----------------------------------------------------------------------------
def _vmem_capacity_bytes() -> int:
    try:
        return int(pltpu.get_tpu_info().vmem_capacity_bytes)
    except Exception:
        return 64 * 1024 * 1024  # conservative (v7x per-TC VMEM)


def _pick_tile_b(B: int, max_tile_b: int) -> int:
    """Rows per grid step: a multiple of 8, or the full batch for a single tile."""
    n_tiles = pl.cdiv(B, max_tile_b)
    if B >= 256:
        # Keep at least 2 batch tiles so the "parallel" axis actually splits
        # across both TensorCores on v7x (harmless no-op on v5e/v6e).
        n_tiles = max(n_tiles, 2)
    if n_tiles == 1:
        return B  # one block spanning the whole batch (legal even if B % 8 != 0)
    return _round_up(pl.cdiv(B, n_tiles), 8)


def _jnp_forward(x, p):
    """Fused XLA fast path with the same bf16-weight / f32-accum numerics."""
    f32 = jnp.float32
    h1 = jnp.maximum(
        jnp.dot(x.astype(jnp.bfloat16), p["W1"], preferred_element_type=f32) + p["b1"], 0.0)
    h2 = jnp.maximum(
        jnp.dot(h1.astype(jnp.bfloat16), p["W2"], preferred_element_type=f32) + p["b2"], 0.0)
    return jnp.dot(h2.astype(jnp.bfloat16), p["W3"], preferred_element_type=f32) + p["b3"]


def mynet_forward(x, params, *, use_pallas=None, out_dtype=jnp.float32):
    """x: [B, dim] float32. params: padded bf16 W ([in,out]) / f32 b ([1,out])."""
    B, dim = x.shape

    if use_pallas is None:
        # pallas_call fixed cost (launch + pipeline prologue) dominates at toy
        # sizes; a fused XLA chain is faster there.
        use_pallas = B * dim >= 65536
    if not use_pallas:
        return _jnp_forward(x, params).astype(out_dtype)

    w1, w2, w3 = params["W1"], params["W2"], params["W3"]   # bf16, padded
    b1, b2, b3 = params["b1"], params["b2"], params["b3"]   # f32, padded

    # --- VMEM budget -> tile_b ----------------------------------------------
    out_itemsize = jnp.dtype(out_dtype).itemsize
    weight_bytes = 2 * sum(int(a.size) * a.dtype.itemsize
                           for a in (w1, b1, w2, b2, w3, b3))  # double-buffered (conservative)
    vmem_cap = _vmem_capacity_bytes()
    budget = min(max(vmem_cap // 2, 24 << 20), 48 << 20)   # stays well inside v7x's 64 MiB
    bytes_per_row = 2 * dim * x.dtype.itemsize + 2 * dim * out_itemsize  # x + out double buffers
    max_tile_b = max(8, min(2048,
                            (max(budget - weight_bytes, 1 << 20) // bytes_per_row) // 8 * 8))
    # TODO(synk): for very large dim, tile the fc3 output dim as a second grid
    # axis instead of only shrinking tile_b.
    tile_b = _pick_tile_b(B, max_tile_b)
    n_tiles = pl.cdiv(B, tile_b)

    vmem_needed = (weight_bytes
                   + 2 * tile_b * dim * x.dtype.itemsize
                   + 2 * tile_b * dim * out_itemsize)
    vmem_limit = int(min(vmem_cap, max(32 << 20, int(vmem_needed * 1.25) + (2 << 20))))

    rows = n_tiles * tile_b
    flops = 2 * rows * (dim * H1 + H1 * H2 + H2 * dim)
    bytes_accessed = (B * dim * x.dtype.itemsize
                      + B * dim * out_itemsize
                      + (w1.size + w2.size + w3.size) * 2
                      + (b1.size + b2.size + b3.size) * 4)

    resident = lambda i: (0, 0)  # weights/biases: same block every grid step (no re-DMA)

    out = pl.pallas_call(
        mlp_kernel,
        out_shape=jax.ShapeDtypeStruct((B, dim), out_dtype),
        grid=(n_tiles,),
        in_specs=[
            pl.BlockSpec((tile_b, dim), lambda i: (i, 0)),   # x tile (f32; bf16 cast in-kernel)
            pl.BlockSpec((dim, H1), resident),               # W1 (bf16, resident)
            pl.BlockSpec((1, H1), resident),                 # b1
            pl.BlockSpec((H1, H2), resident),                # W2
            pl.BlockSpec((1, H2), resident),                 # b2
            pl.BlockSpec((H2, dim), resident),               # W3
            pl.BlockSpec((1, dim), resident),                # b3
        ],
        out_specs=pl.BlockSpec((tile_b, dim), lambda i: (i, 0)),
        compiler_params=pltpu.CompilerParams(
            dimension_semantics=("parallel",),   # shard batch tiles across TCs (v7x)
            vmem_limit_bytes=vmem_limit,
        ),
        cost_estimate=pl.CostEstimate(
            flops=flops, transcendentals=0, bytes_accessed=bytes_accessed),
    )(x, w1, b1, w2, b2, w3, b3)

    return out


# ----------------------------------------------------------------------------
# Params / reference
# ----------------------------------------------------------------------------
def init_params(key, dim):
    """nn.Linear-style init (uniform +/- 1/sqrt(fan_in)); weights zero-padded to
    128-lane widths and cast to bf16 ONCE here (not per forward call)."""
    def linear(k, fan_in, fan_out, pad_in, pad_out):
        k_w, k_b = jax.random.split(k)
        bound = float(fan_in) ** -0.5
        W = jax.random.uniform(k_w, (fan_in, fan_out), jnp.float32, -bound, bound)
        b = jax.random.uniform(k_b, (1, fan_out), jnp.float32, -bound, bound)
        Wp = jnp.zeros((pad_in, pad_out), jnp.float32).at[:fan_in, :fan_out].set(W)
        bp = jnp.zeros((1, pad_out), jnp.float32).at[:, :fan_out].set(b)
        return Wp.astype(jnp.bfloat16), bp

    k1, k2, k3 = jax.random.split(key, 3)
    W1, b1 = linear(k1, dim, 64, dim, H1)     # [dim, 128] bf16
    W2, b2 = linear(k2, 64, 120, H1, H2)      # [128, 128] bf16
    W3, b3 = linear(k3, 120, dim, H2, dim)    # [128, dim] bf16
    return {"W1": W1, "b1": b1, "W2": W2, "b2": b2, "W3": W3, "b3": b3}


def reference_forward(x, p):
    """Pure-JAX reference mirroring the kernel's bf16 quantization (f32 accumulation)."""
    q = lambda a: a.astype(jnp.bfloat16).astype(jnp.float32)
    hp = jax.lax.Precision.HIGHEST
    h1 = jnp.maximum(jnp.dot(q(x), q(p["W1"]), precision=hp) + p["b1"], 0.0)
    h2 = jnp.maximum(jnp.dot(q(h1), q(p["W2"]), precision=hp) + p["b2"], 0.0)
    return jnp.dot(q(h2), q(p["W3"]), precision=hp) + p["b3"]


# ----------------------------------------------------------------------------
# Test
# ----------------------------------------------------------------------------
if __name__ == "__main__":
    key = jax.random.PRNGKey(0)
    k_param, k_x1, k_x2 = jax.random.split(key, 3)

    dim = 32
    params = init_params(k_param, dim)

    # Small shape consistent with MyNet(dim=32) -- forced through the Pallas path.
    x_small = jax.random.normal(k_x1, (8, dim), jnp.float32)
    out_small = jax.block_until_ready(mynet_forward(x_small, params, use_pallas=True))
    ref_small = reference_forward(x_small, params)
    assert out_small.shape == (8, dim)
    assert jnp.allclose(out_small, ref_small, atol=1e-2, rtol=1e-2), "small-batch mismatch"

    # Modest batch exercising the multi-tile grid and the write-masked partial block.
    x_big = jax.random.normal(k_x2, (300, dim), jnp.float32)
    out_big = jax.block_until_ready(mynet_forward(x_big, params, use_pallas=True))
    ref_big = reference_forward(x_big, params)
    assert out_big.shape == (300, dim)
    assert jnp.allclose(out_big, ref_big, atol=1e-2, rtol=1e-2), "tiled-batch mismatch"

    # Auto-dispatch (fast path at toy sizes) still runs.
    _ = jax.block_until_ready(mynet_forward(x_small, params))

    print("KERNEL_OK")
</pallas_src>

<mosaic_0001>
module attributes {stable_mosaic.version = 11 : i64} {
  func.func @mlp_kernel(%arg0: i32, %arg1: memref<8x32xf32, #tpu.memory_space<vmem>>, %arg2: memref<32x128xbf16, #tpu.memory_space<vmem>>, %arg3: memref<1x128xf32, #tpu.memory_space<vmem>>, %arg4: memref<128x128xbf16, #tpu.memory_space<vmem>>, %arg5: memref<1x128xf32, #tpu.memory_space<vmem>>, %arg6: memref<128x32xbf16, #tpu.memory_space<vmem>>, %arg7: memref<1x32xf32, #tpu.memory_space<vmem>>, %arg8: memref<8x32xf32, #tpu.memory_space<vmem>>) attributes {dimension_semantics = [#tpu.dimension_semantics<parallel>], iteration_bounds = array<i64: 1>, scalar_prefetch = 0 : i64, scratch_operands = 0 : i64, tpu.core_type = #tpu.core_type<tc>, window_params = [{transform_indices = @transform_0, window_bounds = array<i64: 8, 32>}, {pipeline_mode = #tpu.pipeline_mode<synchronous>, transform_indices = @transform_1, window_bounds = array<i64: 32, 128>}, {pipeline_mode = #tpu.pipeline_mode<synchronous>, transform_indices = @transform_2, window_bounds = array<i64: 1, 128>}, {pipeline_mode = #tpu.pipeline_mode<synchronous>, transform_indices = @transform_3, window_bounds = array<i64: 128, 128>}, {pipeline_mode = #tpu.pipeline_mode<synchronous>, transform_indices = @transform_4, window_bounds = array<i64: 1, 128>}, {pipeline_mode = #tpu.pipeline_mode<synchronous>, transform_indices = @transform_5, window_bounds = array<i64: 128, 32>}, {pipeline_mode = #tpu.pipeline_mode<synchronous>, transform_indices = @transform_6, window_bounds = array<i64: 1, 32>}, {transform_indices = @transform_7, window_bounds = array<i64: 8, 32>}]} {
    %c0 = arith.constant 0 : index
    %c0_0 = arith.constant 0 : index
    %0 = vector.load %arg1[%c0, %c0_0] : memref<8x32xf32, #tpu.memory_space<vmem>>, vector<8x32xf32>
    %1 = arith.truncf %0 : vector<8x32xf32> to vector<8x32xbf16>
    %c0_1 = arith.constant 0 : index
    %c0_2 = arith.constant 0 : index
    %2 = vector.load %arg2[%c0_1, %c0_2] : memref<32x128xbf16, #tpu.memory_space<vmem>>, vector<32x128xbf16>
    %cst = arith.constant dense<0.000000e+00> : vector<8x128xf32>
    %3 = tpu.matmul %1, %2, %cst {dimension_numbers = #tpu.dot_dimension_numbers<[1], [0], [0], [1], [0, 0, 1, 1], [], []>} : vector<8x32xbf16>, vector<32x128xbf16>, vector<8x128xf32> -> vector<8x128xf32>
    %c0_3 = arith.constant 0 : index
    %c0_4 = arith.constant 0 : index
    %4 = vector.load %arg3[%c0_3, %c0_4] : memref<1x128xf32, #tpu.memory_space<vmem>>, vector<1x128xf32>
    %5 = vector.broadcast %4 : vector<1x128xf32> to vector<8x128xf32>
    %6 = arith.addf %3, %5 : vector<8x128xf32>
    %cst_5 = arith.constant 0.000000e+00 : f32
    %7 = vector.broadcast %cst_5 : f32 to vector<8x128xf32>
    %8 = arith.maximumf %6, %7 : vector<8x128xf32>
    %9 = arith.truncf %8 : vector<8x128xf32> to vector<8x128xbf16>
    %c0_6 = arith.constant 0 : index
    %c0_7 = arith.constant 0 : index
    %10 = vector.load %arg4[%c0_6, %c0_7] : memref<128x128xbf16, #tpu.memory_space<vmem>>, vector<128x128xbf16>
    %cst_8 = arith.constant dense<0.000000e+00> : vector<8x128xf32>
    %11 = tpu.matmul %9, %10, %cst_8 {dimension_numbers = #tpu.dot_dimension_numbers<[1], [0], [0], [1], [0, 0, 1, 1], [], []>} : vector<8x128xbf16>, vector<128x128xbf16>, vector<8x128xf32> -> vector<8x128xf32>
    %c0_9 = arith.constant 0 : index
    %c0_10 = arith.constant 0 : index
    %12 = vector.load %arg5[%c0_9, %c0_10] : memref<1x128xf32, #tpu.memory_space<vmem>>, vector<1x128xf32>
    %13 = vector.broadcast %12 : vector<1x128xf32> to vector<8x128xf32>
    %14 = arith.addf %11, %13 : vector<8x128xf32>
    %cst_11 = arith.constant 0.000000e+00 : f32
    %15 = vector.broadcast %cst_11 : f32 to vector<8x128xf32>
    %16 = arith.maximumf %14, %15 : vector<8x128xf32>
    %17 = arith.truncf %16 : vector<8x128xf32> to vector<8x128xbf16>
    %c0_12 = arith.constant 0 : index
    %c0_13 = arith.constant 0 : index
    %18 = vector.load %arg6[%c0_12, %c0_13] : memref<128x32xbf16, #tpu.memory_space<vmem>>, vector<128x32xbf16>
    %cst_14 = arith.constant dense<0.000000e+00> : vector<8x32xf32>
    %19 = tpu.matmul %17, %18, %cst_14 {dimension_numbers = #tpu.dot_dimension_numbers<[1], [0], [0], [1], [0, 0, 1, 1], [], []>} : vector<8x128xbf16>, vector<128x32xbf16>, vector<8x32xf32> -> vector<8x32xf32>
    %c0_15 = arith.constant 0 : index
    %c0_16 = arith.constant 0 : index
    %20 = vector.load %arg7[%c0_15, %c0_16] : memref<1x32xf32, #tpu.memory_space<vmem>>, vector<1x32xf32>
    %21 = vector.broadcast %20 : vector<1x32xf32> to vector<8x32xf32>
    %22 = arith.addf %19, %21 : vector<8x32xf32>
    %c0_17 = arith.constant 0 : index
    %c0_18 = arith.constant 0 : index
    %23 = vector.load %arg8[%c0_17, %c0_18] : memref<8x32xf32, #tpu.memory_space<vmem>>, vector<8x32xf32>
    tpu.vector_store %arg8[%c0_17, %c0_18], %22 {strides = array<i32>} : memref<8x32xf32, #tpu.memory_space<vmem>>, vector<8x32xf32>,
    return
  }
  func.func @transform_0(%arg0: i32) -> (i32, i32) {
    %c0_i32 = arith.constant 0 : i32
    %c0_i32_0 = arith.constant 0 : i32
    return %arg0, %c0_i32 : i32, i32
  }
  func.func @transform_1(%arg0: i32) -> (i32, i32) {
    %c0_i32 = arith.constant 0 : i32
    %c0_i32_0 = arith.constant 0 : i32
    %c0_i32_1 = arith.constant 0 : i32
    return %c0_i32, %c0_i32_0 : i32, i32
  }
  func.func @transform_2(%arg0: i32) -> (i32, i32) {
    %c0_i32 = arith.constant 0 : i32
    %c0_i32_0 = arith.constant 0 : i32
    %c0_i32_1 = arith.constant 0 : i32
    return %c0_i32, %c0_i32_0 : i32, i32
  }
  func.func @transform_3(%arg0: i32) -> (i32, i32) {
    %c0_i32 = arith.constant 0 : i32
    %c0_i32_0 = arith.constant 0 : i32
    %c0_i32_1 = arith.constant 0 : i32
    return %c0_i32, %c0_i32_0 : i32, i32
  }
  func.func @transform_4(%arg0: i32) -> (i32, i32) {
    %c0_i32 = arith.constant 0 : i32
    %c0_i32_0 = arith.constant 0 : i32
    %c0_i32_1 = arith.constant 0 : i32
    return %c0_i32, %c0_i32_0 : i32, i32
  }
  func.func @transform_5(%arg0: i32) -> (i32, i32) {
    %c0_i32 = arith.constant 0 : i32
    %c0_i32_0 = arith.constant 0 : i32
    %c0_i32_1 = arith.constant 0 : i32
    return %c0_i32, %c0_i32_0 : i32, i32
  }
  func.func @transform_6(%arg0: i32) -> (i32, i32) {
    %c0_i32 = arith.constant 0 : i32
    %c0_i32_0 = arith.constant 0 : i32
    %c0_i32_1 = arith.constant 0 : i32
    return %c0_i32, %c0_i32_0 : i32, i32
  }
  func.func @transform_7(%arg0: i32) -> (i32, i32) {
    %c0_i32 = arith.constant 0 : i32
    %c0_i32_0 = arith.constant 0 : i32
    return %arg0, %c0_i32 : i32, i32
  }
}

</mosaic_0001>

<llo_original>
// kernel: tpu_custom_call.1
$region0: #{tpu_custom_call.1}
  #allocation0 [shape = 'u32[]', space=smem, size = 0x4, offset = 0x4, fixed_abs, tag = 'smem constant byte address 0x4 - core index']
  #allocation1 [shape = 'u32[144,128]{1,0:T(1,128)}', space=vmem, size = 0x12000, scoped, tag = 'internal scratch']
  %s0 = inlined_call_operand.hbm [shape: f32[8,32], index: 0, kind: input, shape index: {}]
  %s1 = inlined_call_operand.vmem [shape: bf16[32,128], index: 1, kind: input, shape index: {}]
  %s2 = inlined_call_operand.vmem [shape: f32[1,128], index: 2, kind: input, shape index: {}]
  %s3 = inlined_call_operand.vmem [shape: bf16[128,128], index: 3, kind: input, shape index: {}]
  %s4 = inlined_call_operand.vmem [shape: f32[1,128], index: 4, kind: input, shape index: {}]
  %s5 = inlined_call_operand.vmem [shape: bf16[128,32], index: 5, kind: input, shape index: {}]
  %s6 = inlined_call_operand.vmem [shape: f32[1,32], index: 6, kind: input, shape index: {}]
  %s7 = inlined_call_operand.hbm [shape: f32[8,32], index: 7, kind: output, shape index: {}]
  %s8 = sld [smem:[#allocation0]]
  $region42: #{tpu_custom_call.1} parent=0
    _
  %s10 = ssub.s32 1, %s8
  %s11 = scalar_select 0, %s10, %s8
  $region1: #{tpu_custom_call.1} parent=0
    #allocation2 [shape = 'u8[4096]{0}', space=vmem, size = 0x1000, scoped, tag = 'input window, operand 0, single buffered']
    #allocation3 [shape = 's32[1]{0}', space=sflag, size = 0x4, scoped, tag = 'scoped memory for tpu_custom_call.1']
    #allocation4 [shape = 's32[1]{0}', space=sflag, size = 0x4, scoped, tag = 'scoped memory for tpu_custom_call.1']
    #allocation5 [shape = 'u8[4096]{0}', space=vmem, size = 0x1000, scoped, tag = 'output window, operand 0, single buffered']
    %12 = vsyncpa [#allocation3], 0
    %13 = vsyncpa [#allocation4], 0
    // Predicated region
    $region2: #{tpu_custom_call.1} parent=1 // pred_check
      _
    $region3: #{tpu_custom_call.1} parent=1 // pred_check_branch
      %15 = sbr.rel (0) target = $region5
    $region4: #{tpu_custom_call.1} parent=1 // pred_region
      %s17 = ssub.s32 128, 128
      %18 = vsyncadd [#allocation3], %s17
      %s20 = sshll.u32 [#allocation2], 4
      %s21 = int_to_ptr.vmem [resolvable:$true] %s20
      %23 = dma.hbm_to_vmem [thread:$0]  %s0, 128, %s21, [#allocation3]
    $region5: #{tpu_custom_call.1} parent=1 // pred_fallthru
      _
    // Predicated region
    $region6: #{tpu_custom_call.1} parent=1 // pred_check
      _
    $region7: #{tpu_custom_call.1} parent=1 // pred_check_branch
      %25 = sbr.rel (0) target = $region9
    $region8: #{tpu_custom_call.1} parent=1 // pred_region
      _
    $region9: #{tpu_custom_call.1} parent=1 // pred_fallthru
      _
    // Predicated region
    $region10: #{tpu_custom_call.1} parent=1 // pred_check
      _
    $region11: #{tpu_custom_call.1} parent=1 // pred_check_branch
      %27 = sbr.rel (0) target = $region13
    $region12: #{tpu_custom_call.1} parent=1 // pred_region
      _
    $region13: #{tpu_custom_call.1} parent=1 // pred_fallthru
      _
    // Predicated region
    $region14: #{tpu_custom_call.1} parent=1 // pred_check
      _
    $region15: #{tpu_custom_call.1} parent=1 // pred_check_branch
      %29 = sbr.rel (0) target = $region17
    $region16: #{tpu_custom_call.1} parent=1 // pred_region
      _
    $region17: #{tpu_custom_call.1} parent=1 // pred_fallthru
      _
    // Predicated region
    $region18: #{tpu_custom_call.1} parent=1 // pred_check
      _
    $region19: #{tpu_custom_call.1} parent=1 // pred_check_branch
      %31 = sbr.rel (0) target = $region21
    $region20: #{tpu_custom_call.1} parent=1 // pred_region
      _
    $region21: #{tpu_custom_call.1} parent=1 // pred_fallthru
      _
    // Predicated region
    $region22: #{tpu_custom_call.1} parent=1 // pred_check
      _
    $region23: #{tpu_custom_call.1} parent=1 // pred_check_branch
      %33 = sbr.rel (0) target = $region25
    $region24: #{tpu_custom_call.1} parent=1 // pred_region
      _
    $region25: #{tpu_custom_call.1} parent=1 // pred_fallthru
      _
    // Predicated region
    $region26: #{tpu_custom_call.1} parent=1 // pred_check
      _
    $region27: #{tpu_custom_call.1} parent=1 // pred_check_branch
      %35 = sbr.rel (0) target = $region29
    $region28: #{tpu_custom_call.1} parent=1 // pred_region
      _
    $region29: #{tpu_custom_call.1} parent=1 // pred_fallthru
      _
    // Predicated region
    $region30: #{tpu_custom_call.1} parent=1 // pred_check
      _
    $region31: #{tpu_custom_call.1} parent=1 // pred_check_branch
      %37 = sbr.rel (0) target = $region33
    $region32: #{tpu_custom_call.1} parent=1 // pred_region
      %38 = dma.done [#allocation3], 128
    $region33: #{tpu_custom_call.1} parent=1 // pred_fallthru
      _
    %v40 = vld [vmem:[#allocation2] sm:$0xff]
    %v41 = vpack.c.bf16 %v40, %v40
    %v42 = vld [vmem:[%s1] sm:$0xf]
    %v43 = vld [vmem:[%s1 + $0x4] sm:$0xf]
    %v44 = vld [vmem:[%s1 + $0x8] sm:$0xf]
    %v45 = vld [vmem:[%s1 + $0xc] sm:$0xf]
    %v46 = vld [vmem:[%s2] sm:$0x1]
    %v48 = vlaneseq
    %v49 = vshrl.u32 %v48, 7
    %v50 = vsub.s32 0, %v49
    %v51 = vrot.slane %v46, %v50
    %v57 = vunpack.c.l.b16 %v42
    %v58 = vunpack.c.l.b16 %v43
    %v59 = vunpack.c.l.b16 %v44
    %v60 = vunpack.c.l.b16 %v45
    %v61 = vpack.c.b16 %v58, %v57
    %v62 = vpack.c.b16 %v60, %v59
    %vm65 = vcmask 261120
    %v67 = vsel %vm65, %v41, 0
    %69 = vmatprep.subr.bf16.mxu0 0
    %70 = vmatpush1.bf16.msra.mxu0 %v61
    %71 = vmatprep.subr.bf16.mxu0 0
    %72 = vmatpush1.bf16.msra.mxu0 %v62
    %73 = vmatprep.subr.bf16.mxu0 0
    %74 = vmatpush1.bf16.msra.mxu0 0
    %75 = vmatprep.subr.bf16.mxu0 0
    %76 = vmatpush1.bf16.msra.mxu0 0
    %77 = vmatprep.subr.bf16.mxu0 0
    %78 = vmatpush1.bf16.msra.mxu0 0
    %79 = vmatprep.subr.bf16.mxu0 0
    %80 = vmatpush1.bf16.msra.mxu0 0
    %81 = vmatprep.subr.bf16.mxu0 0
    %82 = vmatpush1.bf16.msra.mxu0 0
    %83 = vmatprep.subr.bf16.mxu0 0
    %84 = vmatpush1.bf16.msra.mxu0 0
    %85 = vmatprep.subr.bf16.mxu0 0
    %86 = vmatpush1.bf16.msra.mxu0 0
    %87 = vmatprep.subr.bf16.mxu0 0
    %88 = vmatpush1.bf16.msra.mxu0 0
    %89 = vmatprep.subr.bf16.mxu0 0
    %90 = vmatpush1.bf16.msra.mxu0 0
    %91 = vmatprep.subr.bf16.mxu0 0
    %92 = vmatpush1.bf16.msra.mxu0 0
    %93 = vmatprep.subr.bf16.mxu0 0
    %94 = vmatpush1.bf16.msra.mxu0 0
    %95 = vmatprep.subr.bf16.mxu0 0
    %96 = vmatpush1.bf16.msra.mxu0 0
    %97 = vmatprep.subr.bf16.mxu0 0
    %98 = vmatpush1.bf16.msra.mxu0 0
    %99 = vmatprep.subr.bf16.mxu0 0
    %100 = vmatpush1.bf16.msra.mxu0 0
    %101 = vmatprep.mubr.bf16.mxu0 0
    %102 = vmatmul.mubr.bf16.gmra.mrb[0].mxu0 %v67
    %v103 = vpop.f32.mrb[0].mxu0
    %v104 = vadd.f32 %v51, %v103
    %v105 = vpop.f32.mrb[0].mxu0
    %v106 = vpop.f32.mrb[0].mxu0
    %v107 = vpop.f32.mrb[0].mxu0
    %108 = vdwg.mxu0
    %v109 = vmax.f32 %v104, 0.0
    %v110 = vpack.c.bf16 %v109, %v109
    %v111 = vld [vmem:[%s3] sm:$0xf]
    %v112 = vld [vmem:[%s3 + $0x4] sm:$0xf]
    %v113 = vld [vmem:[%s3 + $0x8] sm:$0xf]
    %v114 = vld [vmem:[%s3 + $0xc] sm:$0xf]
    %v115 = vld [vmem:[%s3 + $0x10] sm:$0xf]
    %v116 = vld [vmem:[%s3 + $0x14] sm:$0xf]
    %v117 = vld [vmem:[%s3 + $0x18] sm:$0xf]
    %v118 = vld [vmem:[%s3 + $0x1c] sm:$0xf]
    %v119 = vld [vmem:[%s3 + $0x20] sm:$0xf]
    %v120 = vld [vmem:[%s3 + $0x24] sm:$0xf]
    %v121 = vld [vmem:[%s3 + $0x28] sm:$0xf]
    %v122 = vld [vmem:[%s3 + $0x2c] sm:$0xf]
    %v123 = vld [vmem:[%s3 + $0x30] sm:$0xf]
    %v124 = vld [vmem:[%s3 + $0x34] sm:$0xf]
    %v125 = vld [vmem:[%s3 + $0x38] sm:$0xf]
    %v126 = vld [vmem:[%s3 + $0x3c] sm:$0xf]
    %v127 = vld [vmem:[%s4] sm:$0x1]
    %v129 = vlaneseq
    %v130 = vshrl.u32 %v129, 7
    %v131 = vsub.s32 0, %v130
    %v132 = vrot.slane %v127, %v131
    %v150 = vunpack.c.l.b16 %v111
    %v151 = vunpack.c.l.b16 %v112
    %v152 = vunpack.c.l.b16 %v113
    %v153 = vunpack.c.l.b16 %v114
    %v154 = vunpack.c.l.b16 %v115
    %v155 = vunpack.c.l.b16 %v116
    %v156 = vunpack.c.l.b16 %v117
    %v157 = vunpack.c.l.b16 %v118
    %v158 = vunpack.c.l.b16 %v119
    %v159 = vunpack.c.l.b16 %v120
    %v160 = vunpack.c.l.b16 %v121
    %v161 = vunpack.c.l.b16 %v122
    %v162 = vunpack.c.l.b16 %v123
    %v163 = vunpack.c.l.b16 %v124
    %v164 = vunpack.c.l.b16 %v125
    %v165 = vunpack.c.l.b16 %v126
    %v166 = vpack.c.b16 %v151, %v150
    %v167 = vpack.c.b16 %v153, %v152
    %v168 = vpack.c.b16 %v155, %v154
    %v169 = vpack.c.b16 %v157, %v156
    %v170 = vpack.c.b16 %v159, %v158
    %v171 = vpack.c.b16 %v161, %v160
    %v172 = vpack.c.b16 %v163, %v162
    %v173 = vpack.c.b16 %v165, %v164
    %182 = vmatprep.subr.bf16.mxu0 0
    %183 = vmatpush1.bf16.msra.mxu0 %v166
    %184 = vmatprep.subr.bf16.mxu0 0
    %185 = vmatpush1.bf16.msra.mxu0 %v167
    %186 = vmatprep.subr.bf16.mxu0 0
    %187 = vmatpush1.bf16.msra.mxu0 %v168
    %188 = vmatprep.subr.bf16.mxu0 0
    %189 = vmatpush1.bf16.msra.mxu0 %v169
    %190 = vmatprep.subr.bf16.mxu0 0
    %191 = vmatpush1.bf16.msra.mxu0 %v170
    %192 = vmatprep.subr.bf16.mxu0 0
    %193 = vmatpush1.bf16.msra.mxu0 %v171
    %194 = vmatprep.subr.bf16.mxu0 0
    %195 = vmatpush1.bf16.msra.mxu0 %v172
    %196 = vmatprep.subr.bf16.mxu0 0
    %197 = vmatpush1.bf16.msra.mxu0 %v173
    %198 = vmatprep.subr.bf16.mxu0 0
    %199 = vmatpush1.bf16.msra.mxu0 0
    %200 = vmatprep.subr.bf16.mxu0 0
    %201 = vmatpush1.bf16.msra.mxu0 0
    %202 = vmatprep.subr.bf16.mxu0 0
    %203 = vmatpush1.bf16.msra.mxu0 0
    %204 = vmatprep.subr.bf16.mxu0 0
    %205 = vmatpush1.bf16.msra.mxu0 0
    %206 = vmatprep.subr.bf16.mxu0 0
    %207 = vmatpush1.bf16.msra.mxu0 0
    %208 = vmatprep.subr.bf16.mxu0 0
    %209 = vmatpush1.bf16.msra.mxu0 0
    %210 = vmatprep.subr.bf16.mxu0 0
    %211 = vmatpush1.bf16.msra.mxu0 0
    %212 = vmatprep.subr.bf16.mxu0 0
    %213 = vmatpush1.bf16.msra.mxu0 0
    %214 = vmatprep.mubr.bf16.mxu0 0
    %215 = vmatmul.mubr.bf16.gmra.mrb[0].mxu0 %v110
    %v216 = vpop.f32.mrb[0].mxu0
    %v217 = vadd.f32 %v132, %v216
    %v218 = vpop.f32.mrb[0].mxu0
    %v219 = vpop.f32.mrb[0].mxu0
    %v220 = vpop.f32.mrb[0].mxu0
    %221 = vdwg.mxu0
    %v222 = vmax.f32 %v217, 0.0
    %v223 = vpack.c.bf16 %v222, %v222
    %v224 = vld [vmem:[%s5] sm:$0xf]
    %v225 = vld [vmem:[%s5 + $0x4] sm:$0xf]
    %v226 = vld [vmem:[%s5 + $0x8] sm:$0xf]
    %v227 = vld [vmem:[%s5 + $0xc] sm:$0xf]
    %v228 = vld [vmem:[%s5 + $0x10] sm:$0xf]
    %v229 = vld [vmem:[%s5 + $0x14] sm:$0xf]
    %v230 = vld [vmem:[%s5 + $0x18] sm:$0xf]
    %v231 = vld [vmem:[%s5 + $0x1c] sm:$0xf]
    %v232 = vld [vmem:[%s5 + $0x20] sm:$0xf]
    %v233 = vld [vmem:[%s5 + $0x24] sm:$0xf]
    %v234 = vld [vmem:[%s5 + $0x28] sm:$0xf]
    %v235 = vld [vmem:[%s5 + $0x2c] sm:$0xf]
    %v236 = vld [vmem:[%s5 + $0x30] sm:$0xf]
    %v237 = vld [vmem:[%s5 + $0x34] sm:$0xf]
    %v238 = vld [vmem:[%s5 + $0x38] sm:$0xf]
    %v239 = vld [vmem:[%s5 + $0x3c] sm:$0xf]
    %v240 = vld [vmem:[%s6] sm:$0x1]
    %v242 = vlaneseq
    %v243 = vshrl.u32 %v242, 7
    %v244 = vsub.s32 0, %v243
    %v245 = vrot.slane %v240, %v244
    %v263 = vunpack.c.l.b16 %v224
    %v264 = vunpack.c.l.b16 %v225
    %v265 = vunpack.c.l.b16 %v226
    %v266 = vunpack.c.l.b16 %v227
    %v267 = vunpack.c.l.b16 %v228
    %v268 = vunpack.c.l.b16 %v229
    %v269 = vunpack.c.l.b16 %v230
    %v270 = vunpack.c.l.b16 %v231
    %v271 = vunpack.c.l.b16 %v232
    %v272 = vunpack.c.l.b16 %v233
    %v273 = vunpack.c.l.b16 %v234
    %v274 = vunpack.c.l.b16 %v235
    %v275 = vunpack.c.l.b16 %v236
    %v276 = vunpack.c.l.b16 %v237
    %v277 = vunpack.c.l.b16 %v238
    %v278 = vunpack.c.l.b16 %v239
    %v279 = vpack.c.b16 %v264, %v263
    %v280 = vpack.c.b16 %v266, %v265
    %v281 = vpack.c.b16 %v268, %v267
    %v282 = vpack.c.b16 %v270, %v269
    %v283 = vpack.c.b16 %v272, %v271
    %v284 = vpack.c.b16 %v274, %v273
    %v285 = vpack.c.b16 %v276, %v275
    %v286 = vpack.c.b16 %v278, %v277
    %295 = vmatprep.subr.bf16.mxu0 0
    %296 = vmatpush1.bf16.msra.mxu0 %v279
    %297 = vmatprep.subr.bf16.mxu0 0
    %298 = vmatpush1.bf16.msra.mxu0 %v280
    %299 = vmatprep.subr.bf16.mxu0 0
    %300 = vmatpush1.bf16.msra.mxu0 %v281
    %301 = vmatprep.subr.bf16.mxu0 0
    %302 = vmatpush1.bf16.msra.mxu0 %v282
    %303 = vmatprep.subr.bf16.mxu0 0
    %304 = vmatpush1.bf16.msra.mxu0 %v283
    %305 = vmatprep.subr.bf16.mxu0 0
    %306 = vmatpush1.bf16.msra.mxu0 %v284
    %307 = vmatprep.subr.bf16.mxu0 0
    %308 = vmatpush1.bf16.msra.mxu0 %v285
    %309 = vmatprep.subr.bf16.mxu0 0
    %310 = vmatpush1.bf16.msra.mxu0 %v286
    %311 = vmatprep.subr.bf16.mxu0 0
    %312 = vmatpush1.bf16.msra.mxu0 0
    %313 = vmatprep.subr.bf16.mxu0 0
    %314 = vmatpush1.bf16.msra.mxu0 0
    %315 = vmatprep.subr.bf16.mxu0 0
    %316 = vmatpush1.bf16.msra.mxu0 0
    %317 = vmatprep.subr.bf16.mxu0 0
    %318 = vmatpush1.bf16.msra.mxu0 0
    %319 = vmatprep.subr.bf16.mxu0 0
    %320 = vmatpush1.bf16.msra.mxu0 0
    %321 = vmatprep.subr.bf16.mxu0 0
    %322 = vmatpush1.bf16.msra.mxu0 0
    %323 = vmatprep.subr.bf16.mxu0 0
    %324 = vmatpush1.bf16.msra.mxu0 0
    %325 = vmatprep.subr.bf16.mxu0 0
    %326 = vmatpush1.bf16.msra.mxu0 0
    %327 = vmatprep.mubr.bf16.mxu0 0
    %328 = vmatmul.mubr.bf16.gmra.mrb[0].mxu0 %v223
    %v329 = vpop.f32.mrb[0].mxu0
    %v330 = vadd.f32 %v245, %v329
    %v331 = vpop.f32.mrb[0].mxu0
    %v332 = vpop.f32.mrb[0].mxu0
    %v333 = vpop.f32.mrb[0].mxu0
    %334 = vdwg.mxu0
    %335 = vst.msk [vmem:[#allocation5] sm:$0xff] %vm65, %v330
    // Predicated region
    $region34: #{tpu_custom_call.1} parent=1 // pred_check
      _
    $region35: #{tpu_custom_call.1} parent=1 // pred_check_branch
      %337 = sbr.rel (0) target = $region37
    $region36: #{tpu_custom_call.1} parent=1 // pred_region
      %s339 = ssub.s32 128, 128
      %340 = vsyncadd [#allocation4], %s339
      %s342 = sshll.u32 [#allocation5], 4
      %s343 = int_to_ptr.vmem [resolvable:$true] %s342
      %345 = dma.vmem_to_hbm [thread:$0]  %s343, 128, %s7, [#allocation4]
    $region37: #{tpu_custom_call.1} parent=1 // pred_fallthru
      _
    // Predicated region
    $region38: #{tpu_custom_call.1} parent=1 // pred_check
      _
    $region39: #{tpu_custom_call.1} parent=1 // pred_check_branch
      %347 = sbr.rel (0) target = $region41
    $region40: #{tpu_custom_call.1} parent=1 // pred_region
      %348 = dma.done [#allocation4], 128
    $region41: #{tpu_custom_call.1} parent=1 // pred_fallthru
      _
    %349 = vsyncpa [#allocation3], 1
    %350 = vsyncpa [#allocation4], 1

</llo_original>
